<compile_context>
chip_gen: v6e
topology: v6e:2x2x1
jax: 0.10.0
libtpu: 0.0.40
codegen_flags: <defaults>
</compile_context>

<pallas_src>
import functools

import jax
import jax.numpy as jnp
from jax.experimental import pallas as pl
from jax.experimental.pallas import tpu as pltpu


def _round_up(v, m):
    return ((v + m - 1) // m) * m


def _mlp_kernel(*refs, n_layer):
    """Feature-major fused MLP: every block is (features, batch_tile)."""
    if n_layer > 0:
        (x_ref, w_in_ref, b_in_ref, w_hid_ref, b_hid_ref,
         w_out_ref, b_out_ref, o_ref) = refs
    else:
        x_ref, w_in_ref, b_in_ref, w_out_ref, b_out_ref, o_ref = refs
        w_hid_ref = b_hid_ref = None

    # Input layer: (H, n_input) @ (n_input, tb) on the MXU with f32 accumulate;
    # bias + ReLU in f32, then a single cast to bf16 for the next MXU push.
    h = jnp.dot(w_in_ref[...], x_ref[...], preferred_element_type=jnp.float32)
    h = jnp.maximum(h + b_in_ref[...], 0.0).astype(jnp.bfloat16)

    # Hidden layers: static (unrolled) loop keeps back-to-back MXU pushes
    # visible to the LLO scheduler.
    for i in range(n_layer):
        a = jnp.dot(w_hid_ref[i], h, preferred_element_type=jnp.float32)
        h = jnp.maximum(a + b_hid_ref[i], 0.0).astype(jnp.bfloat16)

    # Output layer (no activation): (OP, H) @ (H, tb) -> lane-dense (OP, tb)
    # f32 store; OP = round_up(n_output, 8), so no 128-wide padded writeback.
    o_ref[...] = (jnp.dot(w_out_ref[...], h, preferred_element_type=jnp.float32)
                  + b_out_ref[...]).astype(o_ref.dtype)


def simple_regression_net(x, params, *, n_layer, block_batch=1024):
    """Fused forward pass of SimpleRegressionNet (eval mode)."""
    w_in, b_in, w_hid, b_hid, w_out, b_out = params
    batch, n_input = x.shape
    n_hidden = w_in.shape[1]
    n_output = w_out.shape[1]

    H = _round_up(n_hidden, 128)           # lane-/MXU-aligned hidden width
    OP = _round_up(max(n_output, 1), 8)    # sublane-aligned output rows

    bf16 = jnp.bfloat16

    # One-time parameter transpose / padding / cast (zero pads keep the math
    # exact: padded rows/cols contribute 0 through every layer).
    w_in_t = jnp.zeros((H, n_input), bf16).at[:n_hidden, :].set(
        w_in.T.astype(bf16))
    b_in_c = jnp.zeros((H, 1), jnp.float32).at[:n_hidden, 0].set(
        b_in.reshape(n_hidden))
    w_out_t = jnp.zeros((OP, H), bf16).at[:n_output, :n_hidden].set(
        w_out.T.astype(bf16))
    b_out_c = jnp.zeros((OP, 1), jnp.float32).at[:n_output, 0].set(
        b_out.reshape(n_output))
    if n_layer > 0:
        w_hid_t = jnp.zeros((n_layer, H, H), bf16).at[
            :, :n_hidden, :n_hidden].set(
                jnp.transpose(w_hid, (0, 2, 1)).astype(bf16))
        b_hid_c = jnp.zeros((n_layer, H, 1), jnp.float32).at[
            :, :n_hidden, 0].set(b_hid.reshape(n_layer, n_hidden))

    # Batch tiling: lane-aligned (multiple of 128) tile up to block_batch.
    tb = min(_round_up(block_batch, 128), _round_up(batch, 128))
    padded_batch = _round_up(batch, tb)
    # Keep >= 2 grid steps when possible so the "parallel" batch axis can shard
    # across both v7x TensorCores.
    if padded_batch // tb == 1 and tb >= 256:
        tb = _round_up(tb // 2, 128)
        padded_batch = _round_up(batch, tb)
    grid = (padded_batch // tb,)

    # x: pad batch, transpose to feature-major, cast to bf16 once.
    xp = x if padded_batch == batch else jnp.pad(
        x, ((0, padded_batch - batch), (0, 0)))
    x_t = xp.T.astype(bf16)                               # (n_input, padded_batch)

    const2 = lambda i: (0, 0)
    const3 = lambda i: (0, 0, 0)
    in_specs = [
        pl.BlockSpec((n_input, tb), lambda i: (0, i)),    # x^T: tiled over batch
        pl.BlockSpec((H, n_input), const2),               # w_in^T: VMEM-resident
        pl.BlockSpec((H, 1), const2),                     # b_in: resident
    ]
    operands = [x_t, w_in_t, b_in_c]
    if n_layer > 0:
        in_specs += [pl.BlockSpec((n_layer, H, H), const3),   # w_hid^T stack
                     pl.BlockSpec((n_layer, H, 1), const3)]   # b_hid stack
        operands += [w_hid_t, b_hid_c]
    in_specs += [pl.BlockSpec((OP, H), const2),           # w_out^T: resident
                 pl.BlockSpec((OP, 1), const2)]           # b_out: resident
    operands += [w_out_t, b_out_c]
    out_spec = pl.BlockSpec((OP, tb), lambda i: (0, i))

    # VMEM budget.  Pallas double-buffers every block — including constant-index
    # weight/bias blocks — so count them 2x.  Bias columns are lane-padded to 128.
    w_elems = w_in_t.size + w_out_t.size + (w_hid_t.size if n_layer > 0 else 0)
    bias_rows = H + OP + (n_layer * H if n_layer > 0 else 0)
    weight_bytes = 2 * w_elems * 2
    bias_bytes = 2 * bias_rows * 128 * 4
    io_bytes = 2 * (n_input * tb * 2 + OP * tb * 4)       # x / out double buffers
    act_bytes = 2 * (H * tb * 2 + H * tb * 4)             # bf16 h + f32 accum temps
    needed = weight_bytes + bias_bytes + io_bytes + act_bytes + (4 << 20)
    try:
        device_vmem = int(getattr(pltpu.get_tpu_info(), "vmem_capacity_bytes",
                                  64 << 20))
    except Exception:
        device_vmem = 64 << 20                            # conservative (v7x per-TC)
    cap = max(device_vmem - (8 << 20), 32 << 20)
    vmem_limit = int(min(max(needed, 32 << 20), cap))

    out_t = pl.pallas_call(
        functools.partial(_mlp_kernel, n_layer=n_layer),
        out_shape=jax.ShapeDtypeStruct((OP, padded_batch), jnp.float32),
        grid=grid,
        in_specs=in_specs,
        out_specs=out_spec,
        compiler_params=pltpu.CompilerParams(
            dimension_semantics=("parallel",),
            vmem_limit_bytes=vmem_limit),
    )(*operands)

    # Slice off feature/batch padding and return batch-major (batch, n_output).
    return out_t[:n_output, :batch].T


def init_params(key, n_input, n_output, n_hidden, n_layer):
    """Xavier-uniform weights / PyTorch-default uniform biases.
    Weights are stored already transposed to (in, out)."""
    def xavier(k, fan_in, fan_out):
        limit = jnp.sqrt(6.0 / (fan_in + fan_out))
        return jax.random.uniform(k, (fan_in, fan_out), jnp.float32, -limit, limit)

    def bias(k, fan_in, fan_out):
        bound = 1.0 / jnp.sqrt(jnp.float32(fan_in))
        return jax.random.uniform(k, (1, fan_out), jnp.float32, -bound, bound)

    keys = jax.random.split(key, 2 * (n_layer + 2))
    ki = iter(range(len(keys)))

    w_in = xavier(keys[next(ki)], n_input, n_hidden)
    b_in = bias(keys[next(ki)], n_input, n_hidden)

    w_hs, b_hs = [], []
    for _ in range(n_layer):
        w_hs.append(xavier(keys[next(ki)], n_hidden, n_hidden))
        b_hs.append(bias(keys[next(ki)], n_hidden, n_hidden))
    if n_layer > 0:
        w_hid = jnp.stack(w_hs, axis=0)               # (n_layer, n_hidden, n_hidden)
        b_hid = jnp.stack(b_hs, axis=0)               # (n_layer, 1, n_hidden)
    else:
        w_hid = jnp.zeros((0, n_hidden, n_hidden), jnp.float32)
        b_hid = jnp.zeros((0, 1, n_hidden), jnp.float32)

    w_out = xavier(keys[next(ki)], n_hidden, n_output)
    b_out = bias(keys[next(ki)], n_hidden, n_output)

    return (w_in, b_in, w_hid, b_hid, w_out, b_out)


def reference_forward(x, params, n_layer):
    """Pure-JAX f32 reference (eval-mode dropout = identity)."""
    w_in, b_in, w_hid, b_hid, w_out, b_out = params
    h = jnp.maximum(x @ w_in + b_in, 0.0)
    for i in range(n_layer):
        h = jnp.maximum(h @ w_hid[i] + b_hid[i], 0.0)
    return h @ w_out + b_out


def reference_forward_bf16(x, params, n_layer):
    """Mimics the kernel's bf16-operand / f32-accumulate matmul numerics."""
    w_in, b_in, w_hid, b_hid, w_out, b_out = params
    bf = jnp.bfloat16
    dot = lambda a, b: jnp.dot(a.astype(bf), b.astype(bf),
                               preferred_element_type=jnp.float32)
    h = jnp.maximum(dot(x, w_in) + b_in, 0.0)
    for i in range(n_layer):
        h = jnp.maximum(dot(h, w_hid[i]) + b_hid[i], 0.0)
    return dot(h, w_out) + b_out


if __name__ == "__main__":
    # Small shapes consistent with the module's constructor signature.
    n_input, n_output, n_hidden, n_layer = 16, 4, 32, 2
    batch = 8

    key = jax.random.PRNGKey(0)
    k_x, k_p = jax.random.split(key)

    x = jax.random.normal(k_x, (batch, n_input), jnp.float32)
    params = init_params(k_p, n_input, n_output, n_hidden, n_layer)

    out = simple_regression_net(x, params, n_layer=n_layer)
    out = jax.block_until_ready(out)

    ref_bf16 = reference_forward_bf16(x, params, n_layer)
    ref_f32 = reference_forward(x, params, n_layer)

    assert out.shape == (batch, n_output)
    # Tight check against a reference with identical bf16-matmul numerics.
    assert jnp.allclose(out, ref_bf16, atol=2e-3, rtol=2e-3)
    # Loose check against the full-f32 module semantics.
    assert jnp.allclose(out, ref_f32, atol=5e-2, rtol=5e-2)

    # Also exercise the n_layer == 0 path (no hidden-weight operands).
    params0 = init_params(k_p, n_input, n_output, n_hidden, 0)
    out0 = jax.block_until_ready(simple_regression_net(x, params0, n_layer=0))
    assert out0.shape == (batch, n_output)
    assert jnp.allclose(out0, reference_forward(x, params0, 0), atol=5e-2, rtol=5e-2)

    print("KERNEL_OK")
</pallas_src>

<mosaic_0001>
module attributes {stable_mosaic.version = 11 : i64} {
  func.func @_mlp_kernel(%arg0: i32, %arg1: memref<16x128xbf16, #tpu.memory_space<vmem>>, %arg2: memref<128x16xbf16, #tpu.memory_space<vmem>>, %arg3: memref<128x1xf32, #tpu.memory_space<vmem>>, %arg4: memref<2x128x128xbf16, #tpu.memory_space<vmem>>, %arg5: memref<2x128x1xf32, #tpu.memory_space<vmem>>, %arg6: memref<8x128xbf16, #tpu.memory_space<vmem>>, %arg7: memref<8x1xf32, #tpu.memory_space<vmem>>, %arg8: memref<8x128xf32, #tpu.memory_space<vmem>>) attributes {dimension_semantics = [#tpu.dimension_semantics<parallel>], iteration_bounds = array<i64: 1>, scalar_prefetch = 0 : i64, scratch_operands = 0 : i64, tpu.core_type = #tpu.core_type<tc>, window_params = [{transform_indices = @transform_0, window_bounds = array<i64: 16, 128>}, {pipeline_mode = #tpu.pipeline_mode<synchronous>, transform_indices = @transform_1, window_bounds = array<i64: 128, 16>}, {pipeline_mode = #tpu.pipeline_mode<synchronous>, transform_indices = @transform_2, window_bounds = array<i64: 128, 1>}, {pipeline_mode = #tpu.pipeline_mode<synchronous>, transform_indices = @transform_3, window_bounds = array<i64: 2, 128, 128>}, {pipeline_mode = #tpu.pipeline_mode<synchronous>, transform_indices = @transform_4, window_bounds = array<i64: 2, 128, 1>}, {pipeline_mode = #tpu.pipeline_mode<synchronous>, transform_indices = @transform_5, window_bounds = array<i64: 8, 128>}, {pipeline_mode = #tpu.pipeline_mode<synchronous>, transform_indices = @transform_6, window_bounds = array<i64: 8, 1>}, {transform_indices = @transform_7, window_bounds = array<i64: 8, 128>}]} {
    %c0 = arith.constant 0 : index
    %c0_0 = arith.constant 0 : index
    %0 = vector.load %arg2[%c0, %c0_0] : memref<128x16xbf16, #tpu.memory_space<vmem>>, vector<128x16xbf16>
    %c0_1 = arith.constant 0 : index
    %c0_2 = arith.constant 0 : index
    %1 = vector.load %arg1[%c0_1, %c0_2] : memref<16x128xbf16, #tpu.memory_space<vmem>>, vector<16x128xbf16>
    %cst = arith.constant dense<0.000000e+00> : vector<128x128xf32>
    %2 = tpu.matmul %0, %1, %cst {dimension_numbers = #tpu.dot_dimension_numbers<[1], [0], [0], [1], [0, 0, 1, 1], [], []>} : vector<128x16xbf16>, vector<16x128xbf16>, vector<128x128xf32> -> vector<128x128xf32>
    %c0_3 = arith.constant 0 : index
    %c0_4 = arith.constant 0 : index
    %3 = vector.load %arg3[%c0_3, %c0_4] : memref<128x1xf32, #tpu.memory_space<vmem>>, vector<128x1xf32>
    %4 = vector.broadcast %3 : vector<128x1xf32> to vector<128x128xf32>
    %5 = arith.addf %2, %4 : vector<128x128xf32>
    %cst_5 = arith.constant 0.000000e+00 : f32
    %6 = vector.broadcast %cst_5 : f32 to vector<128x128xf32>
    %7 = arith.maximumf %5, %6 : vector<128x128xf32>
    %8 = arith.truncf %7 : vector<128x128xf32> to vector<128x128xbf16>
    %c0_6 = arith.constant 0 : index
    %c0_7 = arith.constant 0 : index
    %c0_8 = arith.constant 0 : index
    %9 = vector.load %arg4[%c0_6, %c0_7, %c0_8] : memref<2x128x128xbf16, #tpu.memory_space<vmem>>, vector<1x128x128xbf16>
    %10 = vector.shape_cast %9 : vector<1x128x128xbf16> to vector<128x128xbf16>
    %cst_9 = arith.constant dense<0.000000e+00> : vector<128x128xf32>
    %11 = tpu.matmul %10, %8, %cst_9 {dimension_numbers = #tpu.dot_dimension_numbers<[1], [0], [0], [1], [0, 0, 1, 1], [], []>} : vector<128x128xbf16>, vector<128x128xbf16>, vector<128x128xf32> -> vector<128x128xf32>
    %c0_10 = arith.constant 0 : index
    %c0_11 = arith.constant 0 : index
    %c0_12 = arith.constant 0 : index
    %12 = vector.load %arg5[%c0_10, %c0_11, %c0_12] : memref<2x128x1xf32, #tpu.memory_space<vmem>>, vector<1x128x1xf32>
    %13 = vector.shape_cast %12 : vector<1x128x1xf32> to vector<128x1xf32>
    %14 = vector.broadcast %13 : vector<128x1xf32> to vector<128x128xf32>
    %15 = arith.addf %11, %14 : vector<128x128xf32>
    %cst_13 = arith.constant 0.000000e+00 : f32
    %16 = vector.broadcast %cst_13 : f32 to vector<128x128xf32>
    %17 = arith.maximumf %15, %16 : vector<128x128xf32>
    %18 = arith.truncf %17 : vector<128x128xf32> to vector<128x128xbf16>
    %c1 = arith.constant 1 : index
    %c0_14 = arith.constant 0 : index
    %c0_15 = arith.constant 0 : index
    %19 = vector.load %arg4[%c1, %c0_14, %c0_15] : memref<2x128x128xbf16, #tpu.memory_space<vmem>>, vector<1x128x128xbf16>
    %20 = vector.shape_cast %19 : vector<1x128x128xbf16> to vector<128x128xbf16>
    %cst_16 = arith.constant dense<0.000000e+00> : vector<128x128xf32>
    %21 = tpu.matmul %20, %18, %cst_16 {dimension_numbers = #tpu.dot_dimension_numbers<[1], [0], [0], [1], [0, 0, 1, 1], [], []>} : vector<128x128xbf16>, vector<128x128xbf16>, vector<128x128xf32> -> vector<128x128xf32>
    %c1_17 = arith.constant 1 : index
    %c0_18 = arith.constant 0 : index
    %c0_19 = arith.constant 0 : index
    %22 = vector.load %arg5[%c1_17, %c0_18, %c0_19] : memref<2x128x1xf32, #tpu.memory_space<vmem>>, vector<1x128x1xf32>
    %23 = vector.shape_cast %22 : vector<1x128x1xf32> to vector<128x1xf32>
    %24 = vector.broadcast %23 : vector<128x1xf32> to vector<128x128xf32>
    %25 = arith.addf %21, %24 : vector<128x128xf32>
    %cst_20 = arith.constant 0.000000e+00 : f32
    %26 = vector.broadcast %cst_20 : f32 to vector<128x128xf32>
    %27 = arith.maximumf %25, %26 : vector<128x128xf32>
    %28 = arith.truncf %27 : vector<128x128xf32> to vector<128x128xbf16>
    %c0_21 = arith.constant 0 : index
    %c0_22 = arith.constant 0 : index
    %29 = vector.load %arg6[%c0_21, %c0_22] : memref<8x128xbf16, #tpu.memory_space<vmem>>, vector<8x128xbf16>
    %cst_23 = arith.constant dense<0.000000e+00> : vector<8x128xf32>
    %30 = tpu.matmul %29, %28, %cst_23 {dimension_numbers = #tpu.dot_dimension_numbers<[1], [0], [0], [1], [0, 0, 1, 1], [], []>} : vector<8x128xbf16>, vector<128x128xbf16>, vector<8x128xf32> -> vector<8x128xf32>
    %c0_24 = arith.constant 0 : index
    %c0_25 = arith.constant 0 : index
    %31 = vector.load %arg7[%c0_24, %c0_25] : memref<8x1xf32, #tpu.memory_space<vmem>>, vector<8x1xf32>
    %32 = vector.broadcast %31 : vector<8x1xf32> to vector<8x128xf32>
    %33 = arith.addf %30, %32 : vector<8x128xf32>
    %c0_26 = arith.constant 0 : index
    %c0_27 = arith.constant 0 : index
    %34 = vector.load %arg8[%c0_26, %c0_27] : memref<8x128xf32, #tpu.memory_space<vmem>>, vector<8x128xf32>
    tpu.vector_store %arg8[%c0_26, %c0_27], %33 {strides = array<i32>} : memref<8x128xf32, #tpu.memory_space<vmem>>, vector<8x128xf32>,
    return
  }
  func.func @transform_0(%arg0: i32) -> (i32, i32) {
    %c0_i32 = arith.constant 0 : i32
    %c0_i32_0 = arith.constant 0 : i32
    return %c0_i32, %arg0 : i32, i32
  }
  func.func @transform_1(%arg0: i32) -> (i32, i32) {
    %c0_i32 = arith.constant 0 : i32
    %c0_i32_0 = arith.constant 0 : i32
    %c0_i32_1 = arith.constant 0 : i32
    return %c0_i32, %c0_i32_0 : i32, i32
  }
  func.func @transform_2(%arg0: i32) -> (i32, i32) {
    %c0_i32 = arith.constant 0 : i32
    %c0_i32_0 = arith.constant 0 : i32
    %c0_i32_1 = arith.constant 0 : i32
    return %c0_i32, %c0_i32_0 : i32, i32
  }
  func.func @transform_3(%arg0: i32) -> (i32, i32, i32) {
    %c0_i32 = arith.constant 0 : i32
    %c0_i32_0 = arith.constant 0 : i32
    %c0_i32_1 = arith.constant 0 : i32
    %c0_i32_2 = arith.constant 0 : i32
    return %c0_i32, %c0_i32_0, %c0_i32_1 : i32, i32, i32
  }
  func.func @transform_4(%arg0: i32) -> (i32, i32, i32) {
    %c0_i32 = arith.constant 0 : i32
    %c0_i32_0 = arith.constant 0 : i32
    %c0_i32_1 = arith.constant 0 : i32
    %c0_i32_2 = arith.constant 0 : i32
    return %c0_i32, %c0_i32_0, %c0_i32_1 : i32, i32, i32
  }
  func.func @transform_5(%arg0: i32) -> (i32, i32) {
    %c0_i32 = arith.constant 0 : i32
    %c0_i32_0 = arith.constant 0 : i32
    %c0_i32_1 = arith.constant 0 : i32
    return %c0_i32, %c0_i32_0 : i32, i32
  }
  func.func @transform_6(%arg0: i32) -> (i32, i32) {
    %c0_i32 = arith.constant 0 : i32
    %c0_i32_0 = arith.constant 0 : i32
    %c0_i32_1 = arith.constant 0 : i32
    return %c0_i32, %c0_i32_0 : i32, i32
  }
  func.func @transform_7(%arg0: i32) -> (i32, i32) {
    %c0_i32 = arith.constant 0 : i32
    %c0_i32_0 = arith.constant 0 : i32
    return %c0_i32, %arg0 : i32, i32
  }
}

</mosaic_0001>

<llo_original>
// kernel: tpu_custom_call.1
$region0: #{tpu_custom_call.1}
  #allocation0 [shape = 'u32[]', space=smem, size = 0x4, offset = 0x4, fixed_abs, tag = 'smem constant byte address 0x4 - core index']
  #allocation1 [shape = 'u32[144,128]{1,0:T(1,128)}', space=vmem, size = 0x12000, scoped, tag = 'internal scratch']
  %s0 = inlined_call_operand.vmem [shape: bf16[16,128], index: 0, kind: input, shape index: {}]
  %s1 = inlined_call_operand.vmem [shape: bf16[128,16], index: 1, kind: input, shape index: {}]
  %s2 = inlined_call_operand.vmem [shape: f32[128,1], index: 2, kind: input, shape index: {}]
  %s3 = inlined_call_operand.vmem [shape: bf16[2,128,128], index: 3, kind: input, shape index: {}]
  %s4 = inlined_call_operand.vmem [shape: f32[2,128,1], index: 4, kind: input, shape index: {}]
  %s5 = inlined_call_operand.vmem [shape: bf16[8,128], index: 5, kind: input, shape index: {}]
  %s6 = inlined_call_operand.vmem [shape: f32[8,1], index: 6, kind: input, shape index: {}]
  %s7 = inlined_call_operand.hbm [shape: f32[8,128], index: 7, kind: output, shape index: {}]
  %s8 = sld [smem:[#allocation0]]
  $region38: #{tpu_custom_call.1} parent=0
    _
  %s10 = ssub.s32 1, %s8
  %s11 = scalar_select 0, %s10, %s8
  $region1: #{tpu_custom_call.1} parent=0
    #allocation2 [shape = 'u8[4096]{0}', space=vmem, size = 0x1000, scoped, tag = 'output window, operand 0, single buffered']
    #allocation3 [shape = 's32[1]{0}', space=sflag, size = 0x4, scoped, tag = 'scoped memory for tpu_custom_call.1']
    %12 = vsyncpa [#allocation3], 0
    // Predicated region
    $region2: #{tpu_custom_call.1} parent=1 // pred_check
      _
    $region3: #{tpu_custom_call.1} parent=1 // pred_check_branch
      %14 = sbr.rel (0) target = $region5
    $region4: #{tpu_custom_call.1} parent=1 // pred_region
      _
    $region5: #{tpu_custom_call.1} parent=1 // pred_fallthru
      _
    // Predicated region
    $region6: #{tpu_custom_call.1} parent=1 // pred_check
      _
    $region7: #{tpu_custom_call.1} parent=1 // pred_check_branch
      %16 = sbr.rel (0) target = $region9
    $region8: #{tpu_custom_call.1} parent=1 // pred_region
      _
    $region9: #{tpu_custom_call.1} parent=1 // pred_fallthru
      _
    // Predicated region
    $region10: #{tpu_custom_call.1} parent=1 // pred_check
      _
    $region11: #{tpu_custom_call.1} parent=1 // pred_check_branch
      %18 = sbr.rel (0) target = $region13
    $region12: #{tpu_custom_call.1} parent=1 // pred_region
      _
    $region13: #{tpu_custom_call.1} parent=1 // pred_fallthru
      _
    // Predicated region
    $region14: #{tpu_custom_call.1} parent=1 // pred_check
      _
    $region15: #{tpu_custom_call.1} parent=1 // pred_check_branch
      %20 = sbr.rel (0) target = $region17
    $region16: #{tpu_custom_call.1} parent=1 // pred_region
      _
    $region17: #{tpu_custom_call.1} parent=1 // pred_fallthru
      _
    // Predicated region
    $region18: #{tpu_custom_call.1} parent=1 // pred_check
      _
    $region19: #{tpu_custom_call.1} parent=1 // pred_check_branch
      %22 = sbr.rel (0) target = $region21
    $region20: #{tpu_custom_call.1} parent=1 // pred_region
      _
    $region21: #{tpu_custom_call.1} parent=1 // pred_fallthru
      _
    // Predicated region
    $region22: #{tpu_custom_call.1} parent=1 // pred_check
      _
    $region23: #{tpu_custom_call.1} parent=1 // pred_check_branch
      %24 = sbr.rel (0) target = $region25
    $region24: #{tpu_custom_call.1} parent=1 // pred_region
      _
    $region25: #{tpu_custom_call.1} parent=1 // pred_fallthru
      _
    // Predicated region
    $region26: #{tpu_custom_call.1} parent=1 // pred_check
      _
    $region27: #{tpu_custom_call.1} parent=1 // pred_check_branch
      %26 = sbr.rel (0) target = $region29
    $region28: #{tpu_custom_call.1} parent=1 // pred_region
      _
    $region29: #{tpu_custom_call.1} parent=1 // pred_fallthru
      _
    %v28 = vld [vmem:[%s1] sm:$0xf]
    %v29 = vld [vmem:[%s1 + $0x4] sm:$0xf]
    %v30 = vld [vmem:[%s1 + $0x8] sm:$0xf]
    %v31 = vld [vmem:[%s1 + $0xc] sm:$0xf]
    %v32 = vld [vmem:[%s1 + $0x10] sm:$0xf]
    %v33 = vld [vmem:[%s1 + $0x14] sm:$0xf]
    %v34 = vld [vmem:[%s1 + $0x18] sm:$0xf]
    %v35 = vld [vmem:[%s1 + $0x1c] sm:$0xf]
    %v36 = vld [vmem:[%s1 + $0x20] sm:$0xf]
    %v37 = vld [vmem:[%s1 + $0x24] sm:$0xf]
    %v38 = vld [vmem:[%s1 + $0x28] sm:$0xf]
    %v39 = vld [vmem:[%s1 + $0x2c] sm:$0xf]
    %v40 = vld [vmem:[%s1 + $0x30] sm:$0xf]
    %v41 = vld [vmem:[%s1 + $0x34] sm:$0xf]
    %v42 = vld [vmem:[%s1 + $0x38] sm:$0xf]
    %v43 = vld [vmem:[%s1 + $0x3c] sm:$0xf]
    %v44 = vld [vmem:[%s0] sm:$0xf]
    %v45 = vld [vmem:[%s0 + $0x4] sm:$0xf]
    %v46 = vld [vmem:[%s2] sm:$0xff]
    %v47 = vld [vmem:[%s2 + $0x8] sm:$0xff]
    %v48 = vld [vmem:[%s2 + $0x10] sm:$0xff]
    %v49 = vld [vmem:[%s2 + $0x18] sm:$0xff]
    %v50 = vld [vmem:[%s2 + $0x20] sm:$0xff]
    %v51 = vld [vmem:[%s2 + $0x28] sm:$0xff]
    %v52 = vld [vmem:[%s2 + $0x30] sm:$0xff]
    %v53 = vld [vmem:[%s2 + $0x38] sm:$0xff]
    %v54 = vld [vmem:[%s2 + $0x40] sm:$0xff]
    %v55 = vld [vmem:[%s2 + $0x48] sm:$0xff]
    %v56 = vld [vmem:[%s2 + $0x50] sm:$0xff]
    %v57 = vld [vmem:[%s2 + $0x58] sm:$0xff]
    %v58 = vld [vmem:[%s2 + $0x60] sm:$0xff]
    %v59 = vld [vmem:[%s2 + $0x68] sm:$0xff]
    %v60 = vld [vmem:[%s2 + $0x70] sm:$0xff]
    %v61 = vld [vmem:[%s2 + $0x78] sm:$0xff]
    %63 = vset.pattern.permute.xlu0 0
    %64 = vperm.xlu0 %63, %v46
    %v65 = vpop.permute.xlu0 %64
    %68 = vset.pattern.permute.xlu0 0
    %69 = vperm.xlu0 %68, %v47
    %v70 = vpop.permute.xlu0 %69
    %73 = vset.pattern.permute.xlu0 0
    %74 = vperm.xlu0 %73, %v48
    %v75 = vpop.permute.xlu0 %74
    %78 = vset.pattern.permute.xlu0 0
    %79 = vperm.xlu0 %78, %v49
    %v80 = vpop.permute.xlu0 %79
    %83 = vset.pattern.permute.xlu0 0
    %84 = vperm.xlu0 %83, %v50
    %v85 = vpop.permute.xlu0 %84
    %88 = vset.pattern.permute.xlu0 0
    %89 = vperm.xlu0 %88, %v51
    %v90 = vpop.permute.xlu0 %89
    %93 = vset.pattern.permute.xlu0 0
    %94 = vperm.xlu0 %93, %v52
    %v95 = vpop.permute.xlu0 %94
    %98 = vset.pattern.permute.xlu0 0
    %99 = vperm.xlu0 %98, %v53
    %v100 = vpop.permute.xlu0 %99
    %103 = vset.pattern.permute.xlu0 0
    %104 = vperm.xlu0 %103, %v54
    %v105 = vpop.permute.xlu0 %104
    %108 = vset.pattern.permute.xlu0 0
    %109 = vperm.xlu0 %108, %v55
    %v110 = vpop.permute.xlu0 %109
    %113 = vset.pattern.permute.xlu0 0
    %114 = vperm.xlu0 %113, %v56
    %v115 = vpop.permute.xlu0 %114
    %118 = vset.pattern.permute.xlu0 0
    %119 = vperm.xlu0 %118, %v57
    %v120 = vpop.permute.xlu0 %119
    %123 = vset.pattern.permute.xlu0 0
    %124 = vperm.xlu0 %123, %v58
    %v125 = vpop.permute.xlu0 %124
    %128 = vset.pattern.permute.xlu0 0
    %129 = vperm.xlu0 %128, %v59
    %v130 = vpop.permute.xlu0 %129
    %133 = vset.pattern.permute.xlu0 0
    %134 = vperm.xlu0 %133, %v60
    %v135 = vpop.permute.xlu0 %134
    %138 = vset.pattern.permute.xlu0 0
    %139 = vperm.xlu0 %138, %v61
    %v140 = vpop.permute.xlu0 %139
    %v158 = vunpack.c.l.b16 %v28
    %v159 = vunpack.c.l.b16 %v29
    %v160 = vunpack.c.l.b16 %v30
    %v161 = vunpack.c.l.b16 %v31
    %v162 = vunpack.c.l.b16 %v32
    %v163 = vunpack.c.l.b16 %v33
    %v164 = vunpack.c.l.b16 %v34
    %v165 = vunpack.c.l.b16 %v35
    %v166 = vunpack.c.l.b16 %v36
    %v167 = vunpack.c.l.b16 %v37
    %v168 = vunpack.c.l.b16 %v38
    %v169 = vunpack.c.l.b16 %v39
    %v170 = vunpack.c.l.b16 %v40
    %v171 = vunpack.c.l.b16 %v41
    %v172 = vunpack.c.l.b16 %v42
    %v173 = vunpack.c.l.b16 %v43
    %v174 = vpack.c.b16 %v159, %v158
    %v175 = vpack.c.b16 %v161, %v160
    %v176 = vpack.c.b16 %v163, %v162
    %v177 = vpack.c.b16 %v165, %v164
    %v178 = vpack.c.b16 %v167, %v166
    %v179 = vpack.c.b16 %v169, %v168
    %v180 = vpack.c.b16 %v171, %v170
    %v181 = vpack.c.b16 %v173, %v172
    %v184 = vunpack.c.l.b16 %v44
    %v185 = vunpack.c.l.b16 %v45
    %v186 = vpack.c.b16 %v185, %v184
    %vm188 = vcmask 130048
    %v190 = vsel %vm188, %v174, 0
    %v193 = vsel %vm188, %v175, 0
    %v196 = vsel %vm188, %v176, 0
    %v199 = vsel %vm188, %v177, 0
    %v202 = vsel %vm188, %v178, 0
    %v205 = vsel %vm188, %v179, 0
    %v208 = vsel %vm188, %v180, 0
    %v211 = vsel %vm188, %v181, 0
    %213 = vmatprep.subr.bf16.mxu0 0
    %214 = vmatpush1.bf16.msra.mxu0 0
    %215 = vmatprep.subr.bf16.mxu0 0
    %216 = vmatpush1.bf16.msra.mxu0 0
    %217 = vmatprep.subr.bf16.mxu0 0
    %218 = vmatpush1.bf16.msra.mxu0 0
    %219 = vmatprep.subr.bf16.mxu0 0
    %220 = vmatpush1.bf16.msra.mxu0 0
    %221 = vmatprep.subr.bf16.mxu0 0
    %222 = vmatpush1.bf16.msra.mxu0 0
    %223 = vmatprep.subr.bf16.mxu0 0
    %224 = vmatpush1.bf16.msra.mxu0 0
    %225 = vmatprep.subr.bf16.mxu0 0
    %226 = vmatpush1.bf16.msra.mxu0 0
    %227 = vmatprep.subr.bf16.mxu0 0
    %228 = vmatpush1.bf16.msra.mxu0 %v186
    %229 = vmatprep.subr.bf16.mxu0 0
    %230 = vmatpush2.bf16.msra.mxu0 0
    %231 = vmatprep.subr.bf16.mxu0 0
    %232 = vmatpush2.bf16.msra.mxu0 0
    %233 = vmatprep.subr.bf16.mxu0 0
    %234 = vmatpush2.bf16.msra.mxu0 0
    %235 = vmatprep.subr.bf16.mxu0 0
    %236 = vmatpush2.bf16.msra.mxu0 0
    %237 = vmatprep.subr.bf16.mxu0 0
    %238 = vmatpush2.bf16.msra.mxu0 0
    %239 = vmatprep.subr.bf16.mxu0 0
    %240 = vmatpush2.bf16.msra.mxu0 0
    %241 = vmatprep.subr.bf16.mxu0 0
    %242 = vmatpush2.bf16.msra.mxu0 0
    %243 = vmatprep.subr.bf16.mxu0 0
    %244 = vmatpush2.bf16.msra.mxu0 0
    %245 = vmatprep.mubr.bf16.mxu0 0
    %246 = vmatmul.mubr.bf16.gmra.mxu0 %v190
    %v247 = vpop.f32.mrf.mxu0
    %v248 = vadd.f32 %v65, %v247
    %v249 = vpop.f32.mrf.mxu0
    %v250 = vpop.f32.mrf.mxu0
    %v251 = vadd.f32 %v70, %v250
    %v252 = vpop.f32.mrf.mxu0
    %253 = vmatprep.mubr.bf16.mxu0 0
    %254 = vmatmul.mubr.bf16.gmra.mxu0 %v193
    %v255 = vpop.f32.mrf.mxu0
    %v256 = vadd.f32 %v75, %v255
    %v257 = vpop.f32.mrf.mxu0
    %v258 = vpop.f32.mrf.mxu0
    %v259 = vadd.f32 %v80, %v258
    %v260 = vpop.f32.mrf.mxu0
    %261 = vmatprep.mubr.bf16.mxu0 0
    %262 = vmatmul.mubr.bf16.gmra.mxu0 %v196
    %v263 = vpop.f32.mrf.mxu0
    %v264 = vadd.f32 %v85, %v263
    %v265 = vpop.f32.mrf.mxu0
    %v266 = vpop.f32.mrf.mxu0
    %v267 = vadd.f32 %v90, %v266
    %v268 = vpop.f32.mrf.mxu0
    %269 = vmatprep.mubr.bf16.mxu0 0
    %270 = vmatmul.mubr.bf16.gmra.mxu0 %v199
    %v271 = vpop.f32.mrf.mxu0
    %v272 = vadd.f32 %v95, %v271
    %v273 = vpop.f32.mrf.mxu0
    %v274 = vpop.f32.mrf.mxu0
    %v275 = vadd.f32 %v100, %v274
    %v276 = vpop.f32.mrf.mxu0
    %277 = vmatprep.mubr.bf16.mxu0 0
    %278 = vmatmul.mubr.bf16.gmra.mxu0 %v202
    %v279 = vpop.f32.mrf.mxu0
    %v280 = vadd.f32 %v105, %v279
    %v281 = vpop.f32.mrf.mxu0
    %v282 = vpop.f32.mrf.mxu0
    %v283 = vadd.f32 %v110, %v282
    %v284 = vpop.f32.mrf.mxu0
    %285 = vmatprep.mubr.bf16.mxu0 0
    %286 = vmatmul.mubr.bf16.gmra.mxu0 %v205
    %v287 = vpop.f32.mrf.mxu0
    %v288 = vadd.f32 %v115, %v287
    %v289 = vpop.f32.mrf.mxu0
    %v290 = vpop.f32.mrf.mxu0
    %v291 = vadd.f32 %v120, %v290
    %v292 = vpop.f32.mrf.mxu0
    %293 = vmatprep.mubr.bf16.mxu0 0
    %294 = vmatmul.mubr.bf16.gmra.mxu0 %v208
    %v295 = vpop.f32.mrf.mxu0
    %v296 = vadd.f32 %v125, %v295
    %v297 = vpop.f32.mrf.mxu0
    %v298 = vpop.f32.mrf.mxu0
    %v299 = vadd.f32 %v130, %v298
    %v300 = vpop.f32.mrf.mxu0
    %301 = vmatprep.mubr.bf16.mxu0 0
    %302 = vmatmul.mubr.bf16.gmra.mxu0 %v211
    %v303 = vpop.f32.mrf.mxu0
    %v304 = vadd.f32 %v135, %v303
    %v305 = vpop.f32.mrf.mxu0
    %v306 = vpop.f32.mrf.mxu0
    %v307 = vadd.f32 %v140, %v306
    %v308 = vpop.f32.mrf.mxu0
    %309 = vdwg.mxu0
    %v310 = vmax.f32 %v248, 0.0
    %v311 = vmax.f32 %v251, 0.0
    %v312 = vmax.f32 %v256, 0.0
    %v313 = vmax.f32 %v259, 0.0
    %v314 = vmax.f32 %v264, 0.0
    %v315 = vmax.f32 %v267, 0.0
    %v316 = vmax.f32 %v272, 0.0
    %v317 = vmax.f32 %v275, 0.0
    %v318 = vmax.f32 %v280, 0.0
    %v319 = vmax.f32 %v283, 0.0
    %v320 = vmax.f32 %v288, 0.0
    %v321 = vmax.f32 %v291, 0.0
    %v322 = vmax.f32 %v296, 0.0
    %v323 = vmax.f32 %v299, 0.0
    %v324 = vmax.f32 %v304, 0.0
    %v325 = vmax.f32 %v307, 0.0
    %v326 = vpack.c.bf16 %v311, %v310
    %v327 = vpack.c.bf16 %v313, %v312
    %v328 = vpack.c.bf16 %v315, %v314
    %v329 = vpack.c.bf16 %v317, %v316
    %v330 = vpack.c.bf16 %v319, %v318
    %v331 = vpack.c.bf16 %v321, %v320
    %v332 = vpack.c.bf16 %v323, %v322
    %v333 = vpack.c.bf16 %v325, %v324
    %v334 = vld [vmem:[%s3] sm:$0xf]
    %v335 = vld [vmem:[%s3 + $0x4] sm:$0xf]
    %v336 = vld [vmem:[%s3 + $0x8] sm:$0xf]
    %v337 = vld [vmem:[%s3 + $0xc] sm:$0xf]
    %v338 = vld [vmem:[%s3 + $0x10] sm:$0xf]
    %v339 = vld [vmem:[%s3 + $0x14] sm:$0xf]
    %v340 = vld [vmem:[%s3 + $0x18] sm:$0xf]
    %v341 = vld [vmem:[%s3 + $0x1c] sm:$0xf]
    %v342 = vld [vmem:[%s3 + $0x20] sm:$0xf]
    %v343 = vld [vmem:[%s3 + $0x24] sm:$0xf]
    %v344 = vld [vmem:[%s3 + $0x28] sm:$0xf]
    %v345 = vld [vmem:[%s3 + $0x2c] sm:$0xf]
    %v346 = vld [vmem:[%s3 + $0x30] sm:$0xf]
    %v347 = vld [vmem:[%s3 + $0x34] sm:$0xf]
    %v348 = vld [vmem:[%s3 + $0x38] sm:$0xf]
    %v349 = vld [vmem:[%s3 + $0x3c] sm:$0xf]
    %v350 = vld [vmem:[%s4] sm:$0xff]
    %v351 = vld [vmem:[%s4 + $0x8] sm:$0xff]
    %v352 = vld [vmem:[%s4 + $0x10] sm:$0xff]
    %v353 = vld [vmem:[%s4 + $0x18] sm:$0xff]
    %v354 = vld [vmem:[%s4 + $0x20] sm:$0xff]
    %v355 = vld [vmem:[%s4 + $0x28] sm:$0xff]
    %v356 = vld [vmem:[%s4 + $0x30] sm:$0xff]
    %v357 = vld [vmem:[%s4 + $0x38] sm:$0xff]
    %v358 = vld [vmem:[%s4 + $0x40] sm:$0xff]
    %v359 = vld [vmem:[%s4 + $0x48] sm:$0xff]
    %v360 = vld [vmem:[%s4 + $0x50] sm:$0xff]
    %v361 = vld [vmem:[%s4 + $0x58] sm:$0xff]
    %v362 = vld [vmem:[%s4 + $0x60] sm:$0xff]
    %v363 = vld [vmem:[%s4 + $0x68] sm:$0xff]
    %v364 = vld [vmem:[%s4 + $0x70] sm:$0xff]
    %v365 = vld [vmem:[%s4 + $0x78] sm:$0xff]
    %367 = vset.pattern.permute.xlu0 0
    %368 = vperm.xlu0 %367, %v350
    %v369 = vpop.permute.xlu0 %368
    %372 = vset.pattern.permute.xlu0 0
    %373 = vperm.xlu0 %372, %v351
    %v374 = vpop.permute.xlu0 %373
    %377 = vset.pattern.permute.xlu0 0
    %378 = vperm.xlu0 %377, %v352
    %v379 = vpop.permute.xlu0 %378
    %382 = vset.pattern.permute.xlu0 0
    %383 = vperm.xlu0 %382, %v353
    %v384 = vpop.permute.xlu0 %383
    %387 = vset.pattern.permute.xlu0 0
    %388 = vperm.xlu0 %387, %v354
    %v389 = vpop.permute.xlu0 %388
    %392 = vset.pattern.permute.xlu0 0
    %393 = vperm.xlu0 %392, %v355
    %v394 = vpop.permute.xlu0 %393
    %397 = vset.pattern.permute.xlu0 0
    %398 = vperm.xlu0 %397, %v356
    %v399 = vpop.permute.xlu0 %398
    %402 = vset.pattern.permute.xlu0 0
    %403 = vperm.xlu0 %402, %v357
    %v404 = vpop.permute.xlu0 %403
    %407 = vset.pattern.permute.xlu0 0
    %408 = vperm.xlu0 %407, %v358
    %v409 = vpop.permute.xlu0 %408
    %412 = vset.pattern.permute.xlu0 0
    %413 = vperm.xlu0 %412, %v359
    %v414 = vpop.permute.xlu0 %413
    %417 = vset.pattern.permute.xlu0 0
    %418 = vperm.xlu0 %417, %v360
    %v419 = vpop.permute.xlu0 %418
    %422 = vset.pattern.permute.xlu0 0
    %423 = vperm.xlu0 %422, %v361
    %v424 = vpop.permute.xlu0 %423
    %427 = vset.pattern.permute.xlu0 0
    %428 = vperm.xlu0 %427, %v362
    %v429 = vpop.permute.xlu0 %428
    %432 = vset.pattern.permute.xlu0 0
    %433 = vperm.xlu0 %432, %v363
    %v434 = vpop.permute.xlu0 %433
    %437 = vset.pattern.permute.xlu0 0
    %438 = vperm.xlu0 %437, %v364
    %v439 = vpop.permute.xlu0 %438
    %442 = vset.pattern.permute.xlu0 0
    %443 = vperm.xlu0 %442, %v365
    %v444 = vpop.permute.xlu0 %443
    %v462 = vunpack.c.l.b16 %v334
    %v463 = vunpack.c.l.b16 %v335
    %v464 = vunpack.c.l.b16 %v336
    %v465 = vunpack.c.l.b16 %v337
    %v466 = vunpack.c.l.b16 %v338
    %v467 = vunpack.c.l.b16 %v339
    %v468 = vunpack.c.l.b16 %v340
    %v469 = vunpack.c.l.b16 %v341
    %v470 = vunpack.c.l.b16 %v342
    %v471 = vunpack.c.l.b16 %v343
    %v472 = vunpack.c.l.b16 %v344
    %v473 = vunpack.c.l.b16 %v345
    %v474 = vunpack.c.l.b16 %v346
    %v475 = vunpack.c.l.b16 %v347
    %v476 = vunpack.c.l.b16 %v348
    %v477 = vunpack.c.l.b16 %v349
    %v478 = vpack.c.b16 %v463, %v462
    %v479 = vpack.c.b16 %v465, %v464
    %v480 = vpack.c.b16 %v467, %v466
    %v481 = vpack.c.b16 %v469, %v468
    %v482 = vpack.c.b16 %v471, %v470
    %v483 = vpack.c.b16 %v473, %v472
    %v484 = vpack.c.b16 %v475, %v474
    %v485 = vpack.c.b16 %v477, %v476
    %494 = vmatprep.subr.bf16.mxu0 0
    %495 = vmatpush1.bf16.msra.mxu0 %v333
    %496 = vmatprep.subr.bf16.mxu0 0
    %497 = vmatpush1.bf16.msra.mxu0 %v332
    %498 = vmatprep.subr.bf16.mxu0 0
    %499 = vmatpush1.bf16.msra.mxu0 %v331
    %500 = vmatprep.subr.bf16.mxu0 0
    %501 = vmatpush1.bf16.msra.mxu0 %v330
    %502 = vmatprep.subr.bf16.mxu0 0
    %503 = vmatpush1.bf16.msra.mxu0 %v329
    %504 = vmatprep.subr.bf16.mxu0 0
    %505 = vmatpush1.bf16.msra.mxu0 %v328
    %506 = vmatprep.subr.bf16.mxu0 0
    %507 = vmatpush1.bf16.msra.mxu0 %v327
    %508 = vmatprep.subr.bf16.mxu0 0
    %509 = vmatpush1.bf16.msra.mxu0 %v326
    %510 = vmatprep.subr.bf16.mxu0 0
    %511 = vmatpush2.bf16.msra.mxu0 0
    %512 = vmatprep.subr.bf16.mxu0 0
    %513 = vmatpush2.bf16.msra.mxu0 0
    %514 = vmatprep.subr.bf16.mxu0 0
    %515 = vmatpush2.bf16.msra.mxu0 0
    %516 = vmatprep.subr.bf16.mxu0 0
    %517 = vmatpush2.bf16.msra.mxu0 0
    %518 = vmatprep.subr.bf16.mxu0 0
    %519 = vmatpush2.bf16.msra.mxu0 0
    %520 = vmatprep.subr.bf16.mxu0 0
    %521 = vmatpush2.bf16.msra.mxu0 0
    %522 = vmatprep.subr.bf16.mxu0 0
    %523 = vmatpush2.bf16.msra.mxu0 0
    %524 = vmatprep.subr.bf16.mxu0 0
    %525 = vmatpush2.bf16.msra.mxu0 0
    %526 = vmatprep.mubr.bf16.mxu0 0
    %527 = vmatmul.mubr.bf16.gmra.mxu0 %v478
    %v528 = vpop.f32.mrf.mxu0
    %v529 = vadd.f32 %v369, %v528
    %v530 = vpop.f32.mrf.mxu0
    %v531 = vpop.f32.mrf.mxu0
    %v532 = vadd.f32 %v374, %v531
    %v533 = vpop.f32.mrf.mxu0
    %534 = vmatprep.mubr.bf16.mxu0 0
    %535 = vmatmul.mubr.bf16.gmra.mxu0 %v479
    %v536 = vpop.f32.mrf.mxu0
    %v537 = vadd.f32 %v379, %v536
    %v538 = vpop.f32.mrf.mxu0
    %v539 = vpop.f32.mrf.mxu0
    %v540 = vadd.f32 %v384, %v539
    %v541 = vpop.f32.mrf.mxu0
    %542 = vmatprep.mubr.bf16.mxu0 0
    %543 = vmatmul.mubr.bf16.gmra.mxu0 %v480
    %v544 = vpop.f32.mrf.mxu0
    %v545 = vadd.f32 %v389, %v544
    %v546 = vpop.f32.mrf.mxu0
    %v547 = vpop.f32.mrf.mxu0
    %v548 = vadd.f32 %v394, %v547
    %v549 = vpop.f32.mrf.mxu0
    %550 = vmatprep.mubr.bf16.mxu0 0
    %551 = vmatmul.mubr.bf16.gmra.mxu0 %v481
    %v552 = vpop.f32.mrf.mxu0
    %v553 = vadd.f32 %v399, %v552
    %v554 = vpop.f32.mrf.mxu0
    %v555 = vpop.f32.mrf.mxu0
    %v556 = vadd.f32 %v404, %v555
    %v557 = vpop.f32.mrf.mxu0
    %558 = vmatprep.mubr.bf16.mxu0 0
    %559 = vmatmul.mubr.bf16.gmra.mxu0 %v482
    %v560 = vpop.f32.mrf.mxu0
    %v561 = vadd.f32 %v409, %v560
    %v562 = vpop.f32.mrf.mxu0
    %v563 = vpop.f32.mrf.mxu0
    %v564 = vadd.f32 %v414, %v563
    %v565 = vpop.f32.mrf.mxu0
    %566 = vmatprep.mubr.bf16.mxu0 0
    %567 = vmatmul.mubr.bf16.gmra.mxu0 %v483
    %v568 = vpop.f32.mrf.mxu0
    %v569 = vadd.f32 %v419, %v568
    %v570 = vpop.f32.mrf.mxu0
    %v571 = vpop.f32.mrf.mxu0
    %v572 = vadd.f32 %v424, %v571
    %v573 = vpop.f32.mrf.mxu0
    %574 = vmatprep.mubr.bf16.mxu0 0
    %575 = vmatmul.mubr.bf16.gmra.mxu0 %v484
    %v576 = vpop.f32.mrf.mxu0
    %v577 = vadd.f32 %v429, %v576
    %v578 = vpop.f32.mrf.mxu0
    %v579 = vpop.f32.mrf.mxu0
    %v580 = vadd.f32 %v434, %v579
    %v581 = vpop.f32.mrf.mxu0
    %582 = vmatprep.mubr.bf16.mxu0 0
    %583 = vmatmul.mubr.bf16.gmra.mxu0 %v485
    %v584 = vpop.f32.mrf.mxu0
    %v585 = vadd.f32 %v439, %v584
    %v586 = vpop.f32.mrf.mxu0
    %v587 = vpop.f32.mrf.mxu0
    %v588 = vadd.f32 %v444, %v587
    %v589 = vpop.f32.mrf.mxu0
    %590 = vdwg.mxu0
    %v591 = vmax.f32 %v529, 0.0
    %v592 = vmax.f32 %v532, 0.0
    %v593 = vmax.f32 %v537, 0.0
    %v594 = vmax.f32 %v540, 0.0
    %v595 = vmax.f32 %v545, 0.0
    %v596 = vmax.f32 %v548, 0.0
    %v597 = vmax.f32 %v553, 0.0
    %v598 = vmax.f32 %v556, 0.0
    %v599 = vmax.f32 %v561, 0.0
    %v600 = vmax.f32 %v564, 0.0
    %v601 = vmax.f32 %v569, 0.0
    %v602 = vmax.f32 %v572, 0.0
    %v603 = vmax.f32 %v577, 0.0
    %v604 = vmax.f32 %v580, 0.0
    %v605 = vmax.f32 %v585, 0.0
    %v606 = vmax.f32 %v588, 0.0
    %v607 = vpack.c.bf16 %v592, %v591
    %v608 = vpack.c.bf16 %v594, %v593
    %v609 = vpack.c.bf16 %v596, %v595
    %v610 = vpack.c.bf16 %v598, %v597
    %v611 = vpack.c.bf16 %v600, %v599
    %v612 = vpack.c.bf16 %v602, %v601
    %v613 = vpack.c.bf16 %v604, %v603
    %v614 = vpack.c.bf16 %v606, %v605
    %s615 = scalar_lea.vmem %s3, 64
    %v616 = vld [vmem:[%s615] sm:$0xf]
    %v617 = vld [vmem:[%s615 + $0x4] sm:$0xf]
    %v618 = vld [vmem:[%s615 + $0x8] sm:$0xf]
    %v619 = vld [vmem:[%s615 + $0xc] sm:$0xf]
    %v620 = vld [vmem:[%s615 + $0x10] sm:$0xf]
    %v621 = vld [vmem:[%s615 + $0x14] sm:$0xf]
    %v622 = vld [vmem:[%s615 + $0x18] sm:$0xf]
    %v623 = vld [vmem:[%s615 + $0x1c] sm:$0xf]
    %v624 = vld [vmem:[%s615 + $0x20] sm:$0xf]
    %v625 = vld [vmem:[%s615 + $0x24] sm:$0xf]
    %v626 = vld [vmem:[%s615 + $0x28] sm:$0xf]
    %v627 = vld [vmem:[%s615 + $0x2c] sm:$0xf]
    %v628 = vld [vmem:[%s615 + $0x30] sm:$0xf]
    %v629 = vld [vmem:[%s615 + $0x34] sm:$0xf]
    %v630 = vld [vmem:[%s615 + $0x38] sm:$0xf]
    %v631 = vld [vmem:[%s615 + $0x3c] sm:$0xf]
    %s632 = scalar_lea.vmem %s4, 128
    %v633 = vld [vmem:[%s632] sm:$0xff]
    %v634 = vld [vmem:[%s632 + $0x8] sm:$0xff]
    %v635 = vld [vmem:[%s632 + $0x10] sm:$0xff]
    %v636 = vld [vmem:[%s632 + $0x18] sm:$0xff]
    %v637 = vld [vmem:[%s632 + $0x20] sm:$0xff]
    %v638 = vld [vmem:[%s632 + $0x28] sm:$0xff]
    %v639 = vld [vmem:[%s632 + $0x30] sm:$0xff]
    %v640 = vld [vmem:[%s632 + $0x38] sm:$0xff]
    %v641 = vld [vmem:[%s632 + $0x40] sm:$0xff]
    %v642 = vld [vmem:[%s632 + $0x48] sm:$0xff]
    %v643 = vld [vmem:[%s632 + $0x50] sm:$0xff]
    %v644 = vld [vmem:[%s632 + $0x58] sm:$0xff]
    %v645 = vld [vmem:[%s632 + $0x60] sm:$0xff]
    %v646 = vld [vmem:[%s632 + $0x68] sm:$0xff]
    %v647 = vld [vmem:[%s632 + $0x70] sm:$0xff]
    %v648 = vld [vmem:[%s632 + $0x78] sm:$0xff]
    %650 = vset.pattern.permute.xlu0 0
    %651 = vperm.xlu0 %650, %v633
    %v652 = vpop.permute.xlu0 %651
    %655 = vset.pattern.permute.xlu0 0
    %656 = vperm.xlu0 %655, %v634
    %v657 = vpop.permute.xlu0 %656
    %660 = vset.pattern.permute.xlu0 0
    %661 = vperm.xlu0 %660, %v635
    %v662 = vpop.permute.xlu0 %661
    %665 = vset.pattern.permute.xlu0 0
    %666 = vperm.xlu0 %665, %v636
    %v667 = vpop.permute.xlu0 %666
    %670 = vset.pattern.permute.xlu0 0
    %671 = vperm.xlu0 %670, %v637
    %v672 = vpop.permute.xlu0 %671
    %675 = vset.pattern.permute.xlu0 0
    %676 = vperm.xlu0 %675, %v638
    %v677 = vpop.permute.xlu0 %676
    %680 = vset.pattern.permute.xlu0 0
    %681 = vperm.xlu0 %680, %v639
    %v682 = vpop.permute.xlu0 %681
    %685 = vset.pattern.permute.xlu0 0
    %686 = vperm.xlu0 %685, %v640
    %v687 = vpop.permute.xlu0 %686
    %690 = vset.pattern.permute.xlu0 0
    %691 = vperm.xlu0 %690, %v641
    %v692 = vpop.permute.xlu0 %691
    %695 = vset.pattern.permute.xlu0 0
    %696 = vperm.xlu0 %695, %v642
    %v697 = vpop.permute.xlu0 %696
    %700 = vset.pattern.permute.xlu0 0
    %701 = vperm.xlu0 %700, %v643
    %v702 = vpop.permute.xlu0 %701
    %705 = vset.pattern.permute.xlu0 0
    %706 = vperm.xlu0 %705, %v644
    %v707 = vpop.permute.xlu0 %706
    %710 = vset.pattern.permute.xlu0 0
    %711 = vperm.xlu0 %710, %v645
    %v712 = vpop.permute.xlu0 %711
    %715 = vset.pattern.permute.xlu0 0
    %716 = vperm.xlu0 %715, %v646
    %v717 = vpop.permute.xlu0 %716
    %720 = vset.pattern.permute.xlu0 0
    %721 = vperm.xlu0 %720, %v647
    %v722 = vpop.permute.xlu0 %721
    %725 = vset.pattern.permute.xlu0 0
    %726 = vperm.xlu0 %725, %v648
    %v727 = vpop.permute.xlu0 %726
    %v745 = vunpack.c.l.b16 %v616
    %v746 = vunpack.c.l.b16 %v617
    %v747 = vunpack.c.l.b16 %v618
    %v748 = vunpack.c.l.b16 %v619
    %v749 = vunpack.c.l.b16 %v620
    %v750 = vunpack.c.l.b16 %v621
    %v751 = vunpack.c.l.b16 %v622
    %v752 = vunpack.c.l.b16 %v623
    %v753 = vunpack.c.l.b16 %v624
    %v754 = vunpack.c.l.b16 %v625
    %v755 = vunpack.c.l.b16 %v626
    %v756 = vunpack.c.l.b16 %v627
    %v757 = vunpack.c.l.b16 %v628
    %v758 = vunpack.c.l.b16 %v629
    %v759 = vunpack.c.l.b16 %v630
    %v760 = vunpack.c.l.b16 %v631
    %v761 = vpack.c.b16 %v746, %v745
    %v762 = vpack.c.b16 %v748, %v747
    %v763 = vpack.c.b16 %v750, %v749
    %v764 = vpack.c.b16 %v752, %v751
    %v765 = vpack.c.b16 %v754, %v753
    %v766 = vpack.c.b16 %v756, %v755
    %v767 = vpack.c.b16 %v758, %v757
    %v768 = vpack.c.b16 %v760, %v759
    %777 = vmatprep.subr.bf16.mxu0 0
    %778 = vmatpush1.bf16.msra.mxu0 %v614
    %779 = vmatprep.subr.bf16.mxu0 0
    %780 = vmatpush1.bf16.msra.mxu0 %v613
    %781 = vmatprep.subr.bf16.mxu0 0
    %782 = vmatpush1.bf16.msra.mxu0 %v612
    %783 = vmatprep.subr.bf16.mxu0 0
    %784 = vmatpush1.bf16.msra.mxu0 %v611
    %785 = vmatprep.subr.bf16.mxu0 0
    %786 = vmatpush1.bf16.msra.mxu0 %v610
    %787 = vmatprep.subr.bf16.mxu0 0
    %788 = vmatpush1.bf16.msra.mxu0 %v609
    %789 = vmatprep.subr.bf16.mxu0 0
    %790 = vmatpush1.bf16.msra.mxu0 %v608
    %791 = vmatprep.subr.bf16.mxu0 0
    %792 = vmatpush1.bf16.msra.mxu0 %v607
    %793 = vmatprep.subr.bf16.mxu0 0
    %794 = vmatpush2.bf16.msra.mxu0 0
    %795 = vmatprep.subr.bf16.mxu0 0
    %796 = vmatpush2.bf16.msra.mxu0 0
    %797 = vmatprep.subr.bf16.mxu0 0
    %798 = vmatpush2.bf16.msra.mxu0 0
    %799 = vmatprep.subr.bf16.mxu0 0
    %800 = vmatpush2.bf16.msra.mxu0 0
    %801 = vmatprep.subr.bf16.mxu0 0
    %802 = vmatpush2.bf16.msra.mxu0 0
    %803 = vmatprep.subr.bf16.mxu0 0
    %804 = vmatpush2.bf16.msra.mxu0 0
    %805 = vmatprep.subr.bf16.mxu0 0
    %806 = vmatpush2.bf16.msra.mxu0 0
    %807 = vmatprep.subr.bf16.mxu0 0
    %808 = vmatpush2.bf16.msra.mxu0 0
    %809 = vmatprep.mubr.bf16.mxu0 0
    %810 = vmatmul.mubr.bf16.gmra.mxu0 %v761
    %v811 = vpop.f32.mrf.mxu0
    %v812 = vadd.f32 %v652, %v811
    %v813 = vpop.f32.mrf.mxu0
    %v814 = vpop.f32.mrf.mxu0
    %v815 = vadd.f32 %v657, %v814
    %v816 = vpop.f32.mrf.mxu0
    %817 = vmatprep.mubr.bf16.mxu0 0
    %818 = vmatmul.mubr.bf16.gmra.mxu0 %v762
    %v819 = vpop.f32.mrf.mxu0
    %v820 = vadd.f32 %v662, %v819
    %v821 = vpop.f32.mrf.mxu0
    %v822 = vpop.f32.mrf.mxu0
    %v823 = vadd.f32 %v667, %v822
    %v824 = vpop.f32.mrf.mxu0
    %825 = vmatprep.mubr.bf16.mxu0 0
    %826 = vmatmul.mubr.bf16.gmra.mxu0 %v763
    %v827 = vpop.f32.mrf.mxu0
    %v828 = vadd.f32 %v672, %v827
    %v829 = vpop.f32.mrf.mxu0
    %v830 = vpop.f32.mrf.mxu0
    %v831 = vadd.f32 %v677, %v830
    %v832 = vpop.f32.mrf.mxu0
    %833 = vmatprep.mubr.bf16.mxu0 0
    %834 = vmatmul.mubr.bf16.gmra.mxu0 %v764
    %v835 = vpop.f32.mrf.mxu0
    %v836 = vadd.f32 %v682, %v835
    %v837 = vpop.f32.mrf.mxu0
    %v838 = vpop.f32.mrf.mxu0
    %v839 = vadd.f32 %v687, %v838
    %v840 = vpop.f32.mrf.mxu0
    %841 = vmatprep.mubr.bf16.mxu0 0
    %842 = vmatmul.mubr.bf16.gmra.mxu0 %v765
    %v843 = vpop.f32.mrf.mxu0
    %v844 = vadd.f32 %v692, %v843
    %v845 = vpop.f32.mrf.mxu0
    %v846 = vpop.f32.mrf.mxu0
    %v847 = vadd.f32 %v697, %v846
    %v848 = vpop.f32.mrf.mxu0
    %849 = vmatprep.mubr.bf16.mxu0 0
    %850 = vmatmul.mubr.bf16.gmra.mxu0 %v766
    %v851 = vpop.f32.mrf.mxu0
    %v852 = vadd.f32 %v702, %v851
    %v853 = vpop.f32.mrf.mxu0
    %v854 = vpop.f32.mrf.mxu0
    %v855 = vadd.f32 %v707, %v854
    %v856 = vpop.f32.mrf.mxu0
    %857 = vmatprep.mubr.bf16.mxu0 0
    %858 = vmatmul.mubr.bf16.gmra.mxu0 %v767
    %v859 = vpop.f32.mrf.mxu0
    %v860 = vadd.f32 %v712, %v859
    %v861 = vpop.f32.mrf.mxu0
    %v862 = vpop.f32.mrf.mxu0
    %v863 = vadd.f32 %v717, %v862
    %v864 = vpop.f32.mrf.mxu0
    %865 = vmatprep.mubr.bf16.mxu0 0
    %866 = vmatmul.mubr.bf16.gmra.mxu0 %v768
    %v867 = vpop.f32.mrf.mxu0
    %v868 = vadd.f32 %v722, %v867
    %v869 = vpop.f32.mrf.mxu0
    %v870 = vpop.f32.mrf.mxu0
    %v871 = vadd.f32 %v727, %v870
    %v872 = vpop.f32.mrf.mxu0
    %873 = vdwg.mxu0
    %v874 = vmax.f32 %v812, 0.0
    %v875 = vmax.f32 %v815, 0.0
    %v876 = vmax.f32 %v820, 0.0
    %v877 = vmax.f32 %v823, 0.0
    %v878 = vmax.f32 %v828, 0.0
    %v879 = vmax.f32 %v831, 0.0
    %v880 = vmax.f32 %v836, 0.0
    %v881 = vmax.f32 %v839, 0.0
    %v882 = vmax.f32 %v844, 0.0
    %v883 = vmax.f32 %v847, 0.0
    %v884 = vmax.f32 %v852, 0.0
    %v885 = vmax.f32 %v855, 0.0
    %v886 = vmax.f32 %v860, 0.0
    %v887 = vmax.f32 %v863, 0.0
    %v888 = vmax.f32 %v868, 0.0
    %v889 = vmax.f32 %v871, 0.0
    %v890 = vpack.c.bf16 %v875, %v874
    %v891 = vpack.c.bf16 %v877, %v876
    %v892 = vpack.c.bf16 %v879, %v878
    %v893 = vpack.c.bf16 %v881, %v880
    %v894 = vpack.c.bf16 %v883, %v882
    %v895 = vpack.c.bf16 %v885, %v884
    %v896 = vpack.c.bf16 %v887, %v886
    %v897 = vpack.c.bf16 %v889, %v888
    %v898 = vld [vmem:[%s5] sm:$0xf]
    %v899 = vld [vmem:[%s6] sm:$0xff]
    %901 = vset.pattern.permute.xlu0 0
    %902 = vperm.xlu0 %901, %v899
    %v903 = vpop.permute.xlu0 %902
    %905 = vmatprep.subr.bf16.mxu0 0
    %906 = vmatpush1.bf16.msra.mxu0 %v897
    %907 = vmatprep.subr.bf16.mxu0 0
    %908 = vmatpush1.bf16.msra.mxu0 %v896
    %909 = vmatprep.subr.bf16.mxu0 0
    %910 = vmatpush1.bf16.msra.mxu0 %v895
    %911 = vmatprep.subr.bf16.mxu0 0
    %912 = vmatpush1.bf16.msra.mxu0 %v894
    %913 = vmatprep.subr.bf16.mxu0 0
    %914 = vmatpush1.bf16.msra.mxu0 %v893
    %915 = vmatprep.subr.bf16.mxu0 0
    %916 = vmatpush1.bf16.msra.mxu0 %v892
    %917 = vmatprep.subr.bf16.mxu0 0
    %918 = vmatpush1.bf16.msra.mxu0 %v891
    %919 = vmatprep.subr.bf16.mxu0 0
    %920 = vmatpush1.bf16.msra.mxu0 %v890
    %921 = vmatprep.subr.bf16.mxu0 0
    %922 = vmatpush2.bf16.msra.mxu0 0
    %923 = vmatprep.subr.bf16.mxu0 0
    %924 = vmatpush2.bf16.msra.mxu0 0
    %925 = vmatprep.subr.bf16.mxu0 0
    %926 = vmatpush2.bf16.msra.mxu0 0
    %927 = vmatprep.subr.bf16.mxu0 0
    %928 = vmatpush2.bf16.msra.mxu0 0
    %929 = vmatprep.subr.bf16.mxu0 0
    %930 = vmatpush2.bf16.msra.mxu0 0
    %931 = vmatprep.subr.bf16.mxu0 0
    %932 = vmatpush2.bf16.msra.mxu0 0
    %933 = vmatprep.subr.bf16.mxu0 0
    %934 = vmatpush2.bf16.msra.mxu0 0
    %935 = vmatprep.subr.bf16.mxu0 0
    %936 = vmatpush2.bf16.msra.mxu0 0
    %937 = vmatprep.mubr.bf16.mxu0 0
    %938 = vmatmul.mubr.bf16.gmra.mxu0 %v898
    %v939 = vpop.f32.mrf.mxu0
    %v940 = vadd.f32 %v903, %v939
    %v941 = vpop.f32.mrf.mxu0
    %v942 = vpop.f32.mrf.mxu0
    %v943 = vpop.f32.mrf.mxu0
    %944 = vdwg.mxu0
    %945 = vst [vmem:[#allocation2] sm:$0xff] %v940
    // Predicated region
    $region30: #{tpu_custom_call.1} parent=1 // pred_check
      _
    $region31: #{tpu_custom_call.1} parent=1 // pred_check_branch
      %947 = sbr.rel (0) target = $region33
    $region32: #{tpu_custom_call.1} parent=1 // pred_region
      %s949 = ssub.s32 128, 128
      %950 = vsyncadd [#allocation3], %s949
      %s952 = sshll.u32 [#allocation2], 4
      %s953 = int_to_ptr.vmem [resolvable:$true] %s952
      %955 = dma.vmem_to_hbm [thread:$0]  %s953, 128, %s7, [#allocation3]
    $region33: #{tpu_custom_call.1} parent=1 // pred_fallthru
      _
    // Predicated region
    $region34: #{tpu_custom_call.1} parent=1 // pred_check
      _
    $region35: #{tpu_custom_call.1} parent=1 // pred_check_branch
      %957 = sbr.rel (0) target = $region37
    $region36: #{tpu_custom_call.1} parent=1 // pred_region
      %958 = dma.done [#allocation3], 128
    $region37: #{tpu_custom_call.1} parent=1 // pred_fallthru
      _
    %959 = vsyncpa [#allocation3], 1

</llo_original>
